<compile_context>
chip_gen: v5e
topology: v5e:2x2
jax: 0.10.0
libtpu: 0.0.40
codegen_flags: <defaults>
</compile_context>

<pallas_src>
import math

import jax
import jax.numpy as jnp
from jax.experimental import pallas as pl
from jax.experimental.pallas import tpu as pltpu


def _vmem_capacity_bytes() -> int:
    """Physical VMEM of the current chip; conservative fallback = v7x 64 MiB."""
    try:
        return int(pltpu.get_tpu_info().vmem_capacity_bytes)
    except Exception:
        return 64 * 1024 * 1024


def _sublane_align(itemsize: int) -> int:
    """Rows per sublane-packed vreg block: f32 -> 8, bf16 -> 16, int8/fp8 -> 32."""
    return {4: 8, 2: 16, 1: 32}.get(int(itemsize), 8)


def _plan_tiles(b_eff: int, f_eff: int, x_itemsize: int, out_itemsize: int):
    """Choose (tb, tf, vmem_limit_bytes) sized by bytes-per-step, not rows."""
    per_elem = x_itemsize + out_itemsize          # x tile + out tile bytes/element
    align = _sublane_align(x_itemsize)
    vmem_cap = _vmem_capacity_bytes()
    # Live buffers = 2 double-buffered x tiles + 2 double-buffered out tiles
    # (+ tiny mean/var vectors). Keep them well under physical VMEM on every
    # generation (v7x: 64 MiB physical).
    budget = min(48 * 1024 * 1024, vmem_cap // 2)

    def live_bytes(tb, tf):
        return 2 * tb * tf * per_elem

    # Feature-axis tiling only when even a minimal row strip exceeds budget
    # (very wide F). Column tiles must be multiples of 128 (or the full dim).
    tf = f_eff
    if live_bytes(align, f_eff) > budget and f_eff % 128 == 0:
        tf = (budget // (2 * align * per_elem)) // 128 * 128
        tf = max(128, min(tf, f_eff))

    # Batch tile: as many rows as the budget allows (no artificial row cap).
    tb_max = max(1, budget // (2 * tf * per_elem))
    tb = min(tb_max, b_eff)

    # Megacore: if the whole batch fits in one tile but there is enough work,
    # split into two row tiles so the "parallel" axis shards across both TCs.
    if tb >= b_eff and b_eff >= 2 * align:
        tb = -(-b_eff // 2)  # ceil(b_eff / 2)

    # Align to the dtype's sublane packing (full-extent tiles are exempt).
    if tb < b_eff:
        tb = max(align, (tb // align) * align)
    tb = min(tb, b_eff)
    tb = max(1, tb)

    live = live_bytes(tb, tf) + 4 * tf * 4 * 2  # + double-buffered f32 mean/var
    vmem_limit = max(32 * 1024 * 1024, min(int(vmem_cap * 0.75), live + 16 * 1024 * 1024))
    return tb, tf, int(vmem_limit)


def _make_norm_kernel(eps: float, compute_dtype):
    def norm_kernel(x_ref, mean_ref, var_ref, o_ref):
        # mean_ref / var_ref: (1, tf) f32 tiles, constant across the row grid.
        mean = mean_ref[...].astype(jnp.float32)                 # (1, tf)
        var = var_ref[...].astype(jnp.float32)                   # (1, tf)
        inv_std = jax.lax.rsqrt(var + eps)                       # EUP, once/tile
        scale = inv_std.astype(compute_dtype)                    # (1, tf)
        bias = (-mean * inv_std).astype(compute_dtype)           # (1, tf)
        x = x_ref[...].astype(compute_dtype)                     # (tb, tf)
        o_ref[...] = (x * scale + bias).astype(o_ref.dtype)      # single FMA/elem

    return norm_kernel


def base_norm_forward(x, running_mean, running_var, eps: float = 1e-5):
    """Eval-mode BaseNorm forward: (x - running_mean) / sqrt(running_var + eps)."""
    orig_shape = x.shape
    F = orig_shape[-1]
    x2d = x.reshape(-1, F)
    B = x2d.shape[0]

    mean_f32 = running_mean.astype(jnp.float32)
    var_f32 = running_var.astype(jnp.float32)

    # Lane-densify for any F < 128: fold k rows into the lane axis so the
    # output last dim is a multiple of 128 (unmasked full-width stores).
    # Pad the batch with zero rows when B is not a multiple of k (padded rows
    # are sliced off afterwards, so the garbage they produce is discarded).
    if F < 128:
        k = 128 // math.gcd(F, 128)
    else:
        k = 1
    B_pad = -(-B // k) * k
    x_work = x2d if B_pad == B else jnp.pad(x2d, ((0, B_pad - B), (0, 0)))
    B_eff, F_eff = B_pad // k, F * k

    x_eff = x_work.reshape(B_eff, F_eff)
    mean2d = jnp.tile(mean_f32, k).reshape(1, F_eff)
    var2d = jnp.tile(var_f32, k).reshape(1, F_eff)

    # bf16 stays bf16 for the per-element FMA (v6e/v7x bf16 VPU); else f32.
    compute_dtype = jnp.bfloat16 if x.dtype == jnp.bfloat16 else jnp.float32

    tb, tf, vmem_limit = _plan_tiles(B_eff, F_eff, x.dtype.itemsize, x.dtype.itemsize)
    grid = (pl.cdiv(B_eff, tb), pl.cdiv(F_eff, tf))

    out = pl.pallas_call(
        _make_norm_kernel(float(eps), compute_dtype),
        out_shape=jax.ShapeDtypeStruct((B_eff, F_eff), x.dtype),
        grid=grid,
        in_specs=[
            pl.BlockSpec((tb, tf), lambda i, j: (i, j)),
            pl.BlockSpec((1, tf), lambda i, j: (0, j)),
            pl.BlockSpec((1, tf), lambda i, j: (0, j)),
        ],
        out_specs=pl.BlockSpec((tb, tf), lambda i, j: (i, j)),
        compiler_params=pltpu.CompilerParams(
            dimension_semantics=("parallel", "parallel"),
            vmem_limit_bytes=vmem_limit,
        ),
    )(x_eff, mean2d, var2d)

    out = out.reshape(B_pad, F)[:B]
    return out.reshape(orig_shape)


if __name__ == "__main__":
    key = jax.random.PRNGKey(0)
    batch, num_features = 8, 32
    eps = 1e-5

    x = jax.random.normal(key, (batch, num_features), dtype=jnp.float32)

    # Deterministic buffer init, matching BaseNorm.reset_running_stats():
    # running_mean = 0, running_var = 1, count = 0 (count unused in forward).
    running_mean = jnp.zeros((num_features,), dtype=jnp.float32)
    running_var = jnp.ones((num_features,), dtype=jnp.float32)

    out = base_norm_forward(x, running_mean, running_var, eps)
    out = jax.block_until_ready(out)

    # Reference check (pure JAX).
    ref = (x - running_mean[None, :]) / jnp.sqrt(running_var[None, :] + eps)
    assert out.shape == x.shape
    assert jnp.allclose(out, ref, atol=1e-5, rtol=1e-5)

    print("KERNEL_OK")
</pallas_src>

<mosaic_0001>
module attributes {stable_mosaic.version = 11 : i64} {
  func.func @norm_kernel(%arg0: i32, %arg1: i32, %arg2: memref<2x128xf32, #tpu.memory_space<vmem>>, %arg3: memref<1x128xf32, #tpu.memory_space<vmem>>, %arg4: memref<1x128xf32, #tpu.memory_space<vmem>>, %arg5: memref<2x128xf32, #tpu.memory_space<vmem>>) attributes {dimension_semantics = [#tpu.dimension_semantics<parallel>, #tpu.dimension_semantics<parallel>], iteration_bounds = array<i64: 1, 1>, scalar_prefetch = 0 : i64, scratch_operands = 0 : i64, tpu.core_type = #tpu.core_type<tc>, window_params = [{transform_indices = @transform_0, window_bounds = array<i64: 2, 128>}, {transform_indices = @transform_1, window_bounds = array<i64: 1, 128>}, {transform_indices = @transform_2, window_bounds = array<i64: 1, 128>}, {transform_indices = @transform_3, window_bounds = array<i64: 2, 128>}]} {
    %c0 = arith.constant 0 : index
    %c0_0 = arith.constant 0 : index
    %0 = vector.load %arg3[%c0, %c0_0] : memref<1x128xf32, #tpu.memory_space<vmem>>, vector<1x128xf32>
    %c0_1 = arith.constant 0 : index
    %c0_2 = arith.constant 0 : index
    %1 = vector.load %arg4[%c0_1, %c0_2] : memref<1x128xf32, #tpu.memory_space<vmem>>, vector<1x128xf32>
    %cst = arith.constant 9.99999974E-6 : f32
    %2 = vector.broadcast %cst : f32 to vector<1x128xf32>
    %3 = arith.addf %1, %2 : vector<1x128xf32>
    %4 = math.rsqrt %3 : vector<1x128xf32>
    %cst_3 = arith.constant 0.000000e+00 : f32
    %5 = vector.broadcast %cst_3 : f32 to vector<1x128xf32>
    %6 = arith.subf %5, %0 : vector<1x128xf32>
    %7 = arith.mulf %6, %4 : vector<1x128xf32>
    %c0_4 = arith.constant 0 : index
    %c0_5 = arith.constant 0 : index
    %8 = vector.load %arg2[%c0_4, %c0_5] : memref<2x128xf32, #tpu.memory_space<vmem>>, vector<2x128xf32>
    %9 = vector.broadcast %4 : vector<1x128xf32> to vector<2x128xf32>
    %10 = arith.mulf %8, %9 : vector<2x128xf32>
    %11 = vector.broadcast %7 : vector<1x128xf32> to vector<2x128xf32>
    %12 = arith.addf %10, %11 : vector<2x128xf32>
    %c0_6 = arith.constant 0 : index
    %c0_7 = arith.constant 0 : index
    %13 = vector.load %arg5[%c0_6, %c0_7] : memref<2x128xf32, #tpu.memory_space<vmem>>, vector<2x128xf32>
    tpu.vector_store %arg5[%c0_6, %c0_7], %12 {strides = array<i32>} : memref<2x128xf32, #tpu.memory_space<vmem>>, vector<2x128xf32>,
    return
  }
  func.func @transform_0(%arg0: i32, %arg1: i32) -> (i32, i32) {
    %c0_i32 = arith.constant 0 : i32
    return %arg0, %arg1 : i32, i32
  }
  func.func @transform_1(%arg0: i32, %arg1: i32) -> (i32, i32) {
    %c0_i32 = arith.constant 0 : i32
    %c0_i32_0 = arith.constant 0 : i32
    return %c0_i32, %arg1 : i32, i32
  }
  func.func @transform_2(%arg0: i32, %arg1: i32) -> (i32, i32) {
    %c0_i32 = arith.constant 0 : i32
    %c0_i32_0 = arith.constant 0 : i32
    return %c0_i32, %arg1 : i32, i32
  }
  func.func @transform_3(%arg0: i32, %arg1: i32) -> (i32, i32) {
    %c0_i32 = arith.constant 0 : i32
    return %arg0, %arg1 : i32, i32
  }
}

</mosaic_0001>

<llo_original>
// kernel: tpu_custom_call.1
$region0: #{tpu_custom_call.1}
  #allocation0 [shape = 'u32[]', space=smem, size = 0x4, offset = 0x4, fixed_abs, tag = 'smem constant byte address 0x4 - core index']
  #allocation1 [shape = 'u32[72,128]{1,0:T(1,128)}', space=vmem, size = 0x9000, scoped, tag = 'internal scratch']
  %s0 = inlined_call_operand.hbm [shape: f32[2,128], index: 0, kind: input, shape index: {}]
  %s1 = inlined_call_operand.hbm [shape: f32[1,128], index: 1, kind: input, shape index: {}]
  %s2 = inlined_call_operand.vmem [shape: f32[1,128], index: 2, kind: input, shape index: {}]
  %s3 = inlined_call_operand.hbm [shape: f32[2,128], index: 3, kind: output, shape index: {}]
  %s4 = sld [smem:[#allocation0]]
  $region30: #{tpu_custom_call.1} parent=0
    _
  %s6 = ssub.s32 1, %s4
  %s7 = scalar_select 0, %s6, %s4
  $region1: #{tpu_custom_call.1} parent=0
    #allocation2 [shape = 'u8[1024]{0}', space=vmem, size = 0x400, scoped, tag = 'input window, operand 0, single buffered']
    #allocation3 [shape = 's32[1]{0}', space=sflag, size = 0x4, scoped, tag = 'scoped memory for tpu_custom_call.1']
    #allocation4 [shape = 's32[1]{0}', space=sflag, size = 0x4, scoped, tag = 'scoped memory for tpu_custom_call.1']
    #allocation5 [shape = 'u8[512]{0}', space=vmem, size = 0x400, scoped, tag = 'input window, operand 1, single buffered']
    #allocation6 [shape = 's32[1]{0}', space=sflag, size = 0x4, scoped, tag = 'scoped memory for tpu_custom_call.1']
    #allocation7 [shape = 'u8[1024]{0}', space=vmem, size = 0x400, scoped, tag = 'output window, operand 0, single buffered']
    %8 = vsyncpa [#allocation3], 0
    %9 = vsyncpa [#allocation6], 0
    %10 = vsyncpa [#allocation4], 0
    // Predicated region
    $region2: #{tpu_custom_call.1} parent=1 // pred_check
      _
    $region3: #{tpu_custom_call.1} parent=1 // pred_check_branch
      %12 = sbr.rel (0) target = $region5
    $region4: #{tpu_custom_call.1} parent=1 // pred_region
      %14 = vsyncadd [#allocation3], 0
      %s16 = sshll.u32 %s0, 4
      %s17 = int_to_ptr.hbm [resolvable:$true] %s16
      %s18 = sshll.u32 [#allocation2], 4
      %s19 = int_to_ptr.vmem [resolvable:$true] %s18
      %21 = dma.hbm_to_vmem [thread:$0]  %s17, 32, %s19, [#allocation3]
    $region5: #{tpu_custom_call.1} parent=1 // pred_fallthru
      _
    // Predicated region
    $region6: #{tpu_custom_call.1} parent=1 // pred_check
      _
    $region7: #{tpu_custom_call.1} parent=1 // pred_check_branch
      %23 = sbr.rel (0) target = $region9
    $region8: #{tpu_custom_call.1} parent=1 // pred_region
      %25 = vsyncadd [#allocation6], 0
      %s27 = sshll.u32 %s1, 4
      %s28 = int_to_ptr.hbm [resolvable:$true] %s27
      %s29 = sshll.u32 [#allocation5], 4
      %s30 = int_to_ptr.vmem [resolvable:$true] %s29
      %32 = dma.hbm_to_vmem [thread:$0]  %s28, 16, %s30, [#allocation6]
    $region9: #{tpu_custom_call.1} parent=1 // pred_fallthru
      _
    // Predicated region
    $region10: #{tpu_custom_call.1} parent=1 // pred_check
      _
    $region11: #{tpu_custom_call.1} parent=1 // pred_check_branch
      %34 = sbr.rel (0) target = $region13
    $region12: #{tpu_custom_call.1} parent=1 // pred_region
      _
    $region13: #{tpu_custom_call.1} parent=1 // pred_fallthru
      _
    // Predicated region
    $region14: #{tpu_custom_call.1} parent=1 // pred_check
      _
    $region15: #{tpu_custom_call.1} parent=1 // pred_check_branch
      %36 = sbr.rel (0) target = $region17
    $region16: #{tpu_custom_call.1} parent=1 // pred_region
      %38 = dma.done [#allocation3], 32
    $region17: #{tpu_custom_call.1} parent=1 // pred_fallthru
      _
    // Predicated region
    $region18: #{tpu_custom_call.1} parent=1 // pred_check
      _
    $region19: #{tpu_custom_call.1} parent=1 // pred_check_branch
      %40 = sbr.rel (0) target = $region21
    $region20: #{tpu_custom_call.1} parent=1 // pred_region
      %42 = dma.done [#allocation6], 16
    $region21: #{tpu_custom_call.1} parent=1 // pred_fallthru
      _
    %v43 = vld [vmem:[#allocation5] sm:$0x1]
    %v44 = vld [vmem:[%s2] sm:$0x1]
    %v45 = vadd.f32 %v44, 1e-05
    %v46 = vrsqrt.pop %v45
    %v47 = vmul.f32 %v46, %v45
    %v48 = vmul.f32 %v47, %v46
    %v49 = vmul.f32 0.5, %v48
    %v50 = vsub.f32 1.5, %v49
    %v51 = vmul.f32 %v46, %v50
    %vm52 = vweird.f32 %v45
    %vm53 = vweird.f32 %v46
    %vm54 = vmor %vm52, %vm53
    %v55 = vsel %vm54, %v46, %v51
    %v56 = vsub.f32 0.0, %v43
    %v57 = vmul.f32 %v56, %v55
    %v58 = vld [vmem:[#allocation2] sm:$0x3]
    %v60 = vperm.slane %v55, 0
    %v62 = vmul.f32 %v58, %v60
    %v64 = vperm.slane %v57, 0
    %v66 = vadd.f32 %v62, %v64
    %67 = vst [vmem:[#allocation7] sm:$0x3] %v66
    // Predicated region
    $region22: #{tpu_custom_call.1} parent=1 // pred_check
      _
    $region23: #{tpu_custom_call.1} parent=1 // pred_check_branch
      %69 = sbr.rel (0) target = $region25
    $region24: #{tpu_custom_call.1} parent=1 // pred_region
      %71 = vsyncadd [#allocation4], 0
      %s73 = sshll.u32 [#allocation7], 4
      %s74 = int_to_ptr.vmem [resolvable:$true] %s73
      %s75 = sshll.u32 %s3, 4
      %s76 = int_to_ptr.hbm [resolvable:$true] %s75
      %78 = dma.vmem_to_hbm [thread:$0]  %s74, 32, %s76, [#allocation4]
    $region25: #{tpu_custom_call.1} parent=1 // pred_fallthru
      _
    // Predicated region
    $region26: #{tpu_custom_call.1} parent=1 // pred_check
      _
    $region27: #{tpu_custom_call.1} parent=1 // pred_check_branch
      %80 = sbr.rel (0) target = $region29
    $region28: #{tpu_custom_call.1} parent=1 // pred_region
      %82 = dma.done [#allocation4], 32
    $region29: #{tpu_custom_call.1} parent=1 // pred_fallthru
      _
    %83 = vsyncpa [#allocation3], 1
    %84 = vsyncpa [#allocation6], 1
    %85 = vsyncpa [#allocation4], 1

</llo_original>
